<compile_context>
chip_gen: v5e
topology: v5e:2x2
jax: 0.10.0
libtpu: 0.0.40
codegen_flags: <defaults>
</compile_context>

<pallas_src>
import jax
import jax.numpy as jnp
from jax.experimental import pallas as pl
from jax.experimental.pallas import tpu as pltpu


def _vmem_capacity_bytes():
    try:
        return int(pltpu.get_tpu_info().vmem_capacity_bytes)
    except Exception:
        return 128 << 20            # assume v5e/v6e-class if the query fails


def _largest_divisor_leq(n, cap):
    cap = max(1, min(n, cap))
    for d in range(cap, 0, -1):
        if n % d == 0:
            return d
    return 1


# ----------------------------------------------------------------------------
# Fused single-pass path: block = (Nb, C, HW); pool + FCs + scale in one kernel.
# ----------------------------------------------------------------------------
def _sem_fused(x_flat, w1_t, alpha2d, w2_t, *, Nb, use_mxu, vmem_limit_bytes):
    N, C, HW = x_flat.shape
    r = w1_t.shape[1]
    inv_hw = 1.0 / float(HW)
    grid_n = N // Nb

    def kernel(x_ref, w1_ref, a_ref, w2_ref, o_ref):
        x = x_ref[...]                                       # (Nb, C, HW)
        x32 = x.astype(jnp.float32)

        # Global average pool over the lane (spatial) axis; f32 accumulation.
        y = jnp.sum(x32, axis=2) * inv_hw                    # (Nb, C)

        # FC1: (Nb, C) @ (C, r) -> (Nb, r)
        if use_mxu:
            h = jnp.dot(y, w1_ref[...], preferred_element_type=jnp.float32)
        else:
            h = jnp.sum(y[:, :, None] * w1_ref[...][None, :, :], axis=1)

        # PReLU with per hidden-channel slope.
        h = jnp.where(h >= 0.0, h, a_ref[...] * h)

        # FC2: (Nb, r) @ (r, C) -> (Nb, C)
        if use_mxu:
            z = jnp.dot(h, w2_ref[...], preferred_element_type=jnp.float32)
        else:
            z = jnp.sum(h[:, :, None] * w2_ref[...][None, :, :], axis=1)

        s = jax.nn.sigmoid(z)                                # (Nb, C)
        o_ref[...] = (x32 * s[:, :, None]).astype(o_ref.dtype)

    return pl.pallas_call(
        kernel,
        out_shape=jax.ShapeDtypeStruct((N, C, HW), x_flat.dtype),
        grid_spec=pltpu.PrefetchScalarGridSpec(
            num_scalar_prefetch=0,
            grid=(grid_n,),
            in_specs=[
                pl.BlockSpec((Nb, C, HW), lambda i: (i, 0, 0)),   # x
                pl.BlockSpec((C, r), lambda i: (0, 0)),           # w1^T
                pl.BlockSpec((1, r), lambda i: (0, 0)),           # alpha
                pl.BlockSpec((r, C), lambda i: (0, 0)),           # w2^T
            ],
            out_specs=pl.BlockSpec((Nb, C, HW), lambda i: (i, 0, 0)),
        ),
        compiler_params=pltpu.CompilerParams(
            dimension_semantics=("parallel",),
            vmem_limit_bytes=vmem_limit_bytes,
        ),
    )(x_flat, w1_t, alpha2d, w2_t)


# ----------------------------------------------------------------------------
# Two-pass streaming path: per-batch tile too big for VMEM (or N == 1).
# ----------------------------------------------------------------------------
def _sem_two_pass(x_flat, w1_t, alpha2d, w2_t, *, hw_tile, use_mxu,
                  vmem_limit_bytes):
    N, C, HW = x_flat.shape
    r = w1_t.shape[1]
    inv_hw = 1.0 / float(HW)
    n_tiles = pl.cdiv(HW, hw_tile)
    last = n_tiles - 1

    # Pass 1: pooled mean -> FC1 -> PReLU -> FC2 -> sigmoid, per batch element.
    # Output block (1, 1, C) stays resident across the hw-tile axis and doubles
    # as the pooled-sum accumulator.
    def pool_kernel(x_ref, w1_ref, a_ref, w2_ref, s_ref):
        t = pl.program_id(1)

        @pl.when(t == 0)
        def _():
            s_ref[...] = jnp.zeros_like(s_ref)

        # Mask lanes beyond the true HW (last tile may be partial).
        lane = jax.lax.broadcasted_iota(jnp.int32, (1, C, hw_tile), 2) + t * hw_tile
        xblk = jnp.where(lane < HW, x_ref[...].astype(jnp.float32), 0.0)
        s_ref[...] += jnp.sum(xblk, axis=2)[:, None, :]          # (1, 1, C)

        @pl.when(t == last)
        def _():
            y = s_ref[...][:, 0, :] * inv_hw                     # (1, C)
            if use_mxu:
                h = jnp.dot(y, w1_ref[...], preferred_element_type=jnp.float32)
            else:
                h = jnp.sum(y[:, :, None] * w1_ref[...][None, :, :], axis=1)
            h = jnp.where(h >= 0.0, h, a_ref[...] * h)
            if use_mxu:
                z = jnp.dot(h, w2_ref[...], preferred_element_type=jnp.float32)
            else:
                z = jnp.sum(h[:, :, None] * w2_ref[...][None, :, :], axis=1)
            s_ref[...] = jax.nn.sigmoid(z)[:, None, :]           # (1, 1, C)

    s = pl.pallas_call(
        pool_kernel,
        out_shape=jax.ShapeDtypeStruct((N, 1, C), jnp.float32),
        grid_spec=pltpu.PrefetchScalarGridSpec(
            num_scalar_prefetch=0,
            grid=(N, n_tiles),
            in_specs=[
                pl.BlockSpec((1, C, hw_tile), lambda n, t: (n, 0, t)),  # x
                pl.BlockSpec((C, r), lambda n, t: (0, 0)),              # w1^T
                pl.BlockSpec((1, r), lambda n, t: (0, 0)),              # alpha
                pl.BlockSpec((r, C), lambda n, t: (0, 0)),              # w2^T
            ],
            out_specs=pl.BlockSpec((1, 1, C), lambda n, t: (n, 0, 0)),
        ),
        compiler_params=pltpu.CompilerParams(
            dimension_semantics=("parallel", "arbitrary"),
            vmem_limit_bytes=vmem_limit_bytes,
        ),
    )(x_flat, w1_t, alpha2d, w2_t)

    # Pass 2: re-read x tiles and scale by the per-(n, c) gate.
    def scale_kernel(s_ref, x_ref, o_ref):
        gate = s_ref[0, 0, :]                                    # (C,)
        o_ref[...] = (x_ref[...].astype(jnp.float32)
                      * gate[None, :, None]).astype(o_ref.dtype)

    return pl.pallas_call(
        scale_kernel,
        out_shape=jax.ShapeDtypeStruct((N, C, HW), x_flat.dtype),
        grid_spec=pltpu.PrefetchScalarGridSpec(
            num_scalar_prefetch=0,
            grid=(N, n_tiles),
            in_specs=[
                pl.BlockSpec((1, 1, C), lambda n, t: (n, 0, 0)),         # gate
                pl.BlockSpec((1, C, hw_tile), lambda n, t: (n, 0, t)),   # x
            ],
            out_specs=pl.BlockSpec((1, C, hw_tile), lambda n, t: (n, 0, t)),
        ),
        compiler_params=pltpu.CompilerParams(
            dimension_semantics=("parallel", "arbitrary"),
            vmem_limit_bytes=vmem_limit_bytes,
        ),
    )(s, x_flat)


# ----------------------------------------------------------------------------
# Public wrapper.
# ----------------------------------------------------------------------------
def sem_forward(x_nchw, w1, alpha, w2, *,
                target_block_bytes=None,
                vmem_limit_bytes=None,
                force_two_pass=False):
    """x_nchw: (N, C, H, W); w1: (r, C); alpha: (r,); w2: (C, r)."""
    N, C, H, W = x_nchw.shape
    r = w1.shape[0]
    HW = H * W

    # Generation-aware budgets: ~2-4 MiB blocks; VMEM limit = half of physical
    # capacity (32 MiB on v7x, 64 MiB on v5e/v6e).
    vmem_cap = _vmem_capacity_bytes()
    if vmem_limit_bytes is None:
        vmem_limit_bytes = min(64 << 20, max(32 << 20, vmem_cap // 2))
    if target_block_bytes is None:
        target_block_bytes = (4 << 20) if vmem_cap >= (128 << 20) else (2 << 20)

    x_flat = x_nchw.reshape(N, C, HW)                    # free view of NCHW
    w1_t = jnp.transpose(w1).astype(jnp.float32)         # (C, r)
    w2_t = jnp.transpose(w2).astype(jnp.float32)         # (r, C)
    alpha2d = alpha.reshape(1, r).astype(jnp.float32)

    itemsize = jnp.dtype(x_nchw.dtype).itemsize
    bytes_per_batch = C * HW * itemsize
    use_mxu = C >= 128          # MXU dots only pay off at realistic SE widths

    two_pass = (force_two_pass
                or bytes_per_batch > target_block_bytes
                or (N == 1 and bytes_per_batch > (1 << 20)))

    if two_pass:
        lanes = max(128, (target_block_bytes // max(C * itemsize, 1)) // 128 * 128)
        hw_tile = int(min(lanes, HW)) if HW >= 128 else HW
        out = _sem_two_pass(x_flat, w1_t, alpha2d, w2_t,
                            hw_tile=hw_tile, use_mxu=use_mxu,
                            vmem_limit_bytes=vmem_limit_bytes)
    else:
        nb_budget = max(1, target_block_bytes // max(bytes_per_batch, 1))
        nb_steps = max(1, N // 4) if N >= 4 else 1       # aim for >= 4 grid steps
        Nb = _largest_divisor_leq(N, min(nb_budget, nb_steps))
        out = _sem_fused(x_flat, w1_t, alpha2d, w2_t,
                         Nb=Nb, use_mxu=use_mxu,
                         vmem_limit_bytes=vmem_limit_bytes)

    return out.reshape(N, C, H, W)                       # free reshape


def sem_reference(x_nchw, w1, alpha, w2):
    """Pure-JAX reference matching the PyTorch semantics."""
    y = jnp.mean(x_nchw, axis=(2, 3), keepdims=True)             # (N, C, 1, 1)
    y = jnp.einsum("rc,nchw->nrhw", w1, y)                        # (N, r, 1, 1)
    y = jnp.where(y >= 0, y, alpha.reshape(1, -1, 1, 1) * y)      # PReLU
    y = jnp.einsum("cr,nrhw->nchw", w2, y)                        # (N, C, 1, 1)
    y = jax.nn.sigmoid(y)
    return x_nchw * y


if __name__ == "__main__":
    # Module hyper-parameters (`reduction` is the hidden channel count).
    ch_in = 8
    reduction = 4
    N, H, W = 2, 16, 16

    key = jax.random.PRNGKey(0)
    kx, k1, k2 = jax.random.split(key, 3)

    x = jax.random.normal(kx, (N, ch_in, H, W), dtype=jnp.float32)

    # Deterministic synthetic weights (like fresh nn.Conv2d/PReLU params).
    w1 = jax.random.normal(k1, (reduction, ch_in), dtype=jnp.float32) * 0.1
    w2 = jax.random.normal(k2, (ch_in, reduction), dtype=jnp.float32) * 0.1
    alpha = jnp.full((reduction,), 0.02, dtype=jnp.float32)       # PReLU init=0.02

    ref = sem_reference(x, w1, alpha, w2)

    # Main fused single-pass path.
    out = sem_forward(x, w1, alpha, w2)
    jax.block_until_ready(out)
    assert out.shape == x.shape
    assert jnp.allclose(out, ref, atol=1e-5, rtol=1e-5), "fused path mismatch"

    # Also exercise the two-pass streaming fallback (used for large C*H*W or
    # N == 1) with small hw tiles so the accumulation loop is covered.
    out2 = sem_forward(x, w1, alpha, w2, force_two_pass=True,
                       target_block_bytes=4096)
    jax.block_until_ready(out2)
    assert jnp.allclose(out2, ref, atol=1e-5, rtol=1e-5), "two-pass mismatch"

    print("KERNEL_OK")
</pallas_src>

<mosaic_0001>
module attributes {stable_mosaic.version = 11 : i64} {
  func.func @kernel(%arg0: i32, %arg1: memref<1x8x256xf32, #tpu.memory_space<vmem>>, %arg2: memref<8x4xf32, #tpu.memory_space<vmem>>, %arg3: memref<1x4xf32, #tpu.memory_space<vmem>>, %arg4: memref<4x8xf32, #tpu.memory_space<vmem>>, %arg5: memref<1x8x256xf32, #tpu.memory_space<vmem>>) attributes {dimension_semantics = [#tpu.dimension_semantics<parallel>], iteration_bounds = array<i64: 2>, scalar_prefetch = 0 : i64, scratch_operands = 0 : i64, tpu.core_type = #tpu.core_type<tc>, window_params = [{transform_indices = @transform_0, window_bounds = array<i64: 1, 8, 256>}, {pipeline_mode = #tpu.pipeline_mode<synchronous>, transform_indices = @transform_1, window_bounds = array<i64: 8, 4>}, {pipeline_mode = #tpu.pipeline_mode<synchronous>, transform_indices = @transform_2, window_bounds = array<i64: 1, 4>}, {pipeline_mode = #tpu.pipeline_mode<synchronous>, transform_indices = @transform_3, window_bounds = array<i64: 4, 8>}, {transform_indices = @transform_4, window_bounds = array<i64: 1, 8, 256>}]} {
    %c0 = arith.constant 0 : index
    %c0_0 = arith.constant 0 : index
    %c0_1 = arith.constant 0 : index
    %0 = vector.load %arg1[%c0, %c0_0, %c0_1] : memref<1x8x256xf32, #tpu.memory_space<vmem>>, vector<1x8x256xf32>
    %cst = arith.constant dense<0.000000e+00> : vector<1x8xf32>
    %1 = vector.multi_reduction <add>, %0, %cst [2] : vector<1x8x256xf32> to vector<1x8xf32>
    %cst_2 = arith.constant 3.906250e-03 : f32
    %2 = vector.broadcast %cst_2 : f32 to vector<1x8xf32>
    %3 = arith.mulf %1, %2 : vector<1x8xf32>
    %4 = vector.shape_cast %3 : vector<1x8xf32> to vector<1x8x1xf32>
    %c0_3 = arith.constant 0 : index
    %c0_4 = arith.constant 0 : index
    %5 = vector.load %arg2[%c0_3, %c0_4] : memref<8x4xf32, #tpu.memory_space<vmem>>, vector<8x4xf32>
    %6 = vector.shape_cast %5 : vector<8x4xf32> to vector<1x8x4xf32>
    %7 = vector.broadcast %4 : vector<1x8x1xf32> to vector<1x8x4xf32>
    %8 = arith.mulf %7, %6 : vector<1x8x4xf32>
    %cst_5 = arith.constant dense<0.000000e+00> : vector<1x4xf32>
    %9 = vector.multi_reduction <add>, %8, %cst_5 [1] : vector<1x8x4xf32> to vector<1x4xf32>
    %cst_6 = arith.constant 0.000000e+00 : f32
    %10 = vector.broadcast %cst_6 : f32 to vector<1x4xf32>
    %11 = arith.cmpf oge, %9, %10 : vector<1x4xf32>
    %c0_7 = arith.constant 0 : index
    %c0_8 = arith.constant 0 : index
    %12 = vector.load %arg3[%c0_7, %c0_8] : memref<1x4xf32, #tpu.memory_space<vmem>>, vector<1x4xf32>
    %13 = arith.mulf %12, %9 : vector<1x4xf32>
    %14 = arith.select %11, %9, %13 : vector<1x4xi1>, vector<1x4xf32>
    %15 = vector.shape_cast %14 : vector<1x4xf32> to vector<1x4x1xf32>
    %c0_9 = arith.constant 0 : index
    %c0_10 = arith.constant 0 : index
    %16 = vector.load %arg4[%c0_9, %c0_10] : memref<4x8xf32, #tpu.memory_space<vmem>>, vector<4x8xf32>
    %17 = vector.shape_cast %16 : vector<4x8xf32> to vector<1x4x8xf32>
    %18 = vector.broadcast %15 : vector<1x4x1xf32> to vector<1x4x8xf32>
    %19 = arith.mulf %18, %17 : vector<1x4x8xf32>
    %cst_11 = arith.constant dense<0.000000e+00> : vector<1x8xf32>
    %20 = vector.multi_reduction <add>, %19, %cst_11 [1] : vector<1x4x8xf32> to vector<1x8xf32>
    %21 = arith.negf %20 : vector<1x8xf32>
    %22 = math.exp %21 : vector<1x8xf32>
    %cst_12 = arith.constant 1.000000e+00 : f32
    %23 = vector.broadcast %cst_12 : f32 to vector<1x8xf32>
    %24 = arith.addf %23, %22 : vector<1x8xf32>
    %25 = arith.divf %23, %24 : vector<1x8xf32>
    %26 = vector.shape_cast %25 : vector<1x8xf32> to vector<1x8x1xf32>
    %27 = vector.broadcast %26 : vector<1x8x1xf32> to vector<1x8x256xf32>
    %28 = arith.mulf %0, %27 : vector<1x8x256xf32>
    %c0_13 = arith.constant 0 : index
    %c0_14 = arith.constant 0 : index
    %c0_15 = arith.constant 0 : index
    %29 = vector.load %arg5[%c0_13, %c0_14, %c0_15] : memref<1x8x256xf32, #tpu.memory_space<vmem>>, vector<1x8x256xf32>
    tpu.vector_store %arg5[%c0_13, %c0_14, %c0_15], %28 {strides = array<i32>} : memref<1x8x256xf32, #tpu.memory_space<vmem>>, vector<1x8x256xf32>,
    return
  }
  func.func @transform_0(%arg0: i32) -> (i32, i32, i32) {
    %c0_i32 = arith.constant 0 : i32
    %c0_i32_0 = arith.constant 0 : i32
    %c0_i32_1 = arith.constant 0 : i32
    return %arg0, %c0_i32, %c0_i32_0 : i32, i32, i32
  }
  func.func @transform_1(%arg0: i32) -> (i32, i32) {
    %c0_i32 = arith.constant 0 : i32
    %c0_i32_0 = arith.constant 0 : i32
    %c0_i32_1 = arith.constant 0 : i32
    return %c0_i32, %c0_i32_0 : i32, i32
  }
  func.func @transform_2(%arg0: i32) -> (i32, i32) {
    %c0_i32 = arith.constant 0 : i32
    %c0_i32_0 = arith.constant 0 : i32
    %c0_i32_1 = arith.constant 0 : i32
    return %c0_i32, %c0_i32_0 : i32, i32
  }
  func.func @transform_3(%arg0: i32) -> (i32, i32) {
    %c0_i32 = arith.constant 0 : i32
    %c0_i32_0 = arith.constant 0 : i32
    %c0_i32_1 = arith.constant 0 : i32
    return %c0_i32, %c0_i32_0 : i32, i32
  }
  func.func @transform_4(%arg0: i32) -> (i32, i32, i32) {
    %c0_i32 = arith.constant 0 : i32
    %c0_i32_0 = arith.constant 0 : i32
    %c0_i32_1 = arith.constant 0 : i32
    return %arg0, %c0_i32, %c0_i32_0 : i32, i32, i32
  }
}

</mosaic_0001>

<llo_original>
// kernel: tpu_custom_call.1
$region0: #{tpu_custom_call.1}
  #allocation0 [shape = 'u32[]', space=smem, size = 0x4, offset = 0x4, fixed_abs, tag = 'smem constant byte address 0x4 - core index']
  #allocation1 [shape = 'u32[72,128]{1,0:T(1,128)}', space=vmem, size = 0x9000, scoped, tag = 'internal scratch']
  %s0 = inlined_call_operand.hbm [shape: f32[2,8,256], index: 0, kind: input, shape index: {}]
  %s1 = inlined_call_operand.vmem [shape: f32[8,4], index: 1, kind: input, shape index: {}]
  %s2 = inlined_call_operand.vmem [shape: f32[1,4], index: 2, kind: input, shape index: {}]
  %s3 = inlined_call_operand.vmem [shape: f32[4,8], index: 3, kind: input, shape index: {}]
  %s4 = inlined_call_operand.hbm [shape: f32[2,8,256], index: 4, kind: output, shape index: {}]
  %s5 = sld [smem:[#allocation0]]
  $region53: #{tpu_custom_call.1} parent=0
    _
  %s7 = ssub.s32 1, %s5
  %s8 = scalar_select 0, %s7, %s5
  $region1: #{tpu_custom_call.1} parent=0
    #allocation2 [shape = 'u8[16384]{0}', space=vmem, size = 0x4000, scoped, tag = 'input window, operand 0']
    #allocation3 [shape = 's32[2]{0}', space=sflag, size = 0x8, scoped, tag = 'scoped memory for tpu_custom_call.1']
    #allocation4 [shape = 's32[2]{0}', space=sflag, size = 0x8, scoped, tag = 'scoped memory for tpu_custom_call.1']
    #allocation5 [shape = 'u8[16384]{0}', space=vmem, size = 0x4000, scoped, tag = 'output window, operand 0']
    %9 = vsyncpa [#allocation3], 0
    %s10 = scalar_lea.sflag [#allocation3], 1
    %11 = vsyncpa %s10, 0
    %12 = vsyncpa [#allocation4], 0
    %s13 = scalar_lea.sflag [#allocation4], 1
    %14 = vsyncpa %s13, 0
    loop: start=0, step=1, limit=4
    $region2: #{tpu_custom_call.1} parent=1 // loop_pre_header
      _
    $region3: #{tpu_custom_call.1} parent=1 // loop_header
      %s16 = sphi 0, %s20
      %p17 = scmp.ge.s32.totalorder %s16, 4
      %s26 = sphi 0, %s28
      %s29 = sphi 0, %s26
      %s30 = sphi 0, %s29
      %s46 = sphi 0, %s30
      %s50 = sphi 0, %s50
      %s52 = sphi 0, %s50
      %s53 = sphi 0, %s52
      %s67 = sphi 0, %s53
      %s71 = sphi 0, %s71
      %s73 = sphi 0, %s71
      %s74 = sphi 0, %s73
      %s88 = sphi 0, %s74
      %s92 = sphi 0, %s92
      %s94 = sphi 0, %s92
      %s95 = sphi 0, %s94
      %s109 = sphi 0, %s95
      %s115 = sphi 0, %s117
      %s118 = sphi 0, %s115
      %s119 = sphi 0, %s118
      %s135 = sphi 0, %s119
    $region4: #{tpu_custom_call.1} parent=1 // loop_header_branch
      %19 = sbr.rel (%p17) target = $region8
    $region5: #{tpu_custom_call.1} parent=1 // loop_body
      %s21 = ssub.s32 %s16, 1
      %s22 = ssub.s32 %s16, 2
      %s23 = sadd.s32 %s16, 1
      %s24 = ssub.s32 %s16, %s23
      %p25 = scmp.eq.s32.totalorder %s24, 0
      %s27 = sadd.s32 %s26, 1
      %s28 = scalar_select %p25, %s26, %s27
      %p31 = pneg %p25
      %p32 = scmp.eq.s32.totalorder %s16, 1
      %p33 = por %p31, %p32
      %p34 = scmp.ne.s32.totalorder %s26, %s29
      %p35 = scmp.eq.s32.totalorder %s16, 0
      %p36 = por %p34, %p35
      %p37 = scmp.ne.s32.totalorder %s26, %s29
      %p38 = scmp.eq.s32.totalorder %s21, 1
      %p39 = por %p37, %p38
      %p40 = scmp.ne.s32.totalorder %s29, %s30
      %p41 = scmp.eq.s32.totalorder %s21, 0
      %p42 = por %p40, %p41
      %p43 = scmp.ne.s32.totalorder %s29, %s30
      %p44 = scmp.eq.s32.totalorder %s22, 1
      %p45 = por %p43, %p44
      %p47 = scmp.ne.s32.totalorder %s30, %s46
      %p48 = scmp.eq.s32.totalorder %s22, 0
      %p49 = por %p47, %p48
      %s51 = sadd.s32 %s50, 1
      %p54 = scmp.eq.s32.totalorder %s16, 1
      %p55 = scmp.ne.s32.totalorder %s50, %s52
      %p56 = scmp.eq.s32.totalorder %s16, 0
      %p57 = por %p55, %p56
      %p58 = scmp.ne.s32.totalorder %s50, %s52
      %p59 = scmp.eq.s32.totalorder %s21, 1
      %p60 = por %p58, %p59
      %p61 = scmp.ne.s32.totalorder %s52, %s53
      %p62 = scmp.eq.s32.totalorder %s21, 0
      %p63 = por %p61, %p62
      %p64 = scmp.ne.s32.totalorder %s52, %s53
      %p65 = scmp.eq.s32.totalorder %s22, 1
      %p66 = por %p64, %p65
      %p68 = scmp.ne.s32.totalorder %s53, %s67
      %p69 = scmp.eq.s32.totalorder %s22, 0
      %p70 = por %p68, %p69
      %s72 = sadd.s32 %s71, 1
      %p75 = scmp.eq.s32.totalorder %s16, 1
      %p76 = scmp.ne.s32.totalorder %s71, %s73
      %p77 = scmp.eq.s32.totalorder %s16, 0
      %p78 = por %p76, %p77
      %p79 = scmp.ne.s32.totalorder %s71, %s73
      %p80 = scmp.eq.s32.totalorder %s21, 1
      %p81 = por %p79, %p80
      %p82 = scmp.ne.s32.totalorder %s73, %s74
      %p83 = scmp.eq.s32.totalorder %s21, 0
      %p84 = por %p82, %p83
      %p85 = scmp.ne.s32.totalorder %s73, %s74
      %p86 = scmp.eq.s32.totalorder %s22, 1
      %p87 = por %p85, %p86
      %p89 = scmp.ne.s32.totalorder %s74, %s88
      %p90 = scmp.eq.s32.totalorder %s22, 0
      %p91 = por %p89, %p90
      %s93 = sadd.s32 %s92, 1
      %p96 = scmp.eq.s32.totalorder %s16, 1
      %p97 = scmp.ne.s32.totalorder %s92, %s94
      %p98 = scmp.eq.s32.totalorder %s16, 0
      %p99 = por %p97, %p98
      %p100 = scmp.ne.s32.totalorder %s92, %s94
      %p101 = scmp.eq.s32.totalorder %s21, 1
      %p102 = por %p100, %p101
      %p103 = scmp.ne.s32.totalorder %s94, %s95
      %p104 = scmp.eq.s32.totalorder %s21, 0
      %p105 = por %p103, %p104
      %p106 = scmp.ne.s32.totalorder %s94, %s95
      %p107 = scmp.eq.s32.totalorder %s22, 1
      %p108 = por %p106, %p107
      %p110 = scmp.ne.s32.totalorder %s95, %s109
      %p111 = scmp.eq.s32.totalorder %s22, 0
      %p112 = por %p110, %p111
      %s113 = ssub.s32 %s16, %s23
      %p114 = scmp.eq.s32.totalorder %s113, 0
      %s116 = sadd.s32 %s115, 1
      %s117 = scalar_select %p114, %s115, %s116
      %p120 = pneg %p114
      %p121 = scmp.eq.s32.totalorder %s16, 1
      %p122 = por %p120, %p121
      %p123 = scmp.ne.s32.totalorder %s115, %s118
      %p124 = scmp.eq.s32.totalorder %s16, 0
      %p125 = por %p123, %p124
      %p126 = scmp.ne.s32.totalorder %s115, %s118
      %p127 = scmp.eq.s32.totalorder %s21, 1
      %p128 = por %p126, %p127
      %p129 = scmp.ne.s32.totalorder %s118, %s119
      %p130 = scmp.eq.s32.totalorder %s21, 0
      %p131 = por %p129, %p130
      %p132 = scmp.ne.s32.totalorder %s118, %s119
      %p133 = scmp.eq.s32.totalorder %s22, 1
      %p134 = por %p132, %p133
      %p136 = scmp.ne.s32.totalorder %s119, %s135
      %p137 = scmp.eq.s32.totalorder %s22, 0
      %p138 = por %p136, %p137
      %p139 = scmp.le.s32.totalorder 1, %s16
      %p140 = scmp.lt.s32.totalorder %s16, 3
      %p141 = pnand %p139, %p140
      %p142 = pneg %p141
      // Predicated region
      $region9: #{tpu_custom_call.1} parent=5 // pred_check
        _
      $region10: #{tpu_custom_call.1} parent=5 // pred_check_branch
        %144 = sbr.rel (%p141) target = $region12
      $region11: #{tpu_custom_call.1} parent=5 // pred_region
        %s145 = ssub.s32 %s16, 1
        // Predicated region
        $region13: #{tpu_custom_call.1} parent=11 // pred_check
          %p146 = pneg %p63
        $region14: #{tpu_custom_call.1} parent=11 // pred_check_branch
          %148 = sbr.rel (%p146) target = $region16
        $region15: #{tpu_custom_call.1} parent=11 // pred_region
          _
        $region16: #{tpu_custom_call.1} parent=11 // pred_fallthru
          _
        // Predicated region
        $region17: #{tpu_custom_call.1} parent=11 // pred_check
          %p149 = pneg %p84
        $region18: #{tpu_custom_call.1} parent=11 // pred_check_branch
          %151 = sbr.rel (%p149) target = $region20
        $region19: #{tpu_custom_call.1} parent=11 // pred_region
          _
        $region20: #{tpu_custom_call.1} parent=11 // pred_fallthru
          _
        // Predicated region
        $region21: #{tpu_custom_call.1} parent=11 // pred_check
          %p152 = pneg %p105
        $region22: #{tpu_custom_call.1} parent=11 // pred_check_branch
          %154 = sbr.rel (%p152) target = $region24
        $region23: #{tpu_custom_call.1} parent=11 // pred_region
          _
        $region24: #{tpu_custom_call.1} parent=11 // pred_fallthru
          _
      $region12: #{tpu_custom_call.1} parent=5 // pred_fallthru
        _
      %p155 = scmp.lt.s32.totalorder %s16, 2
      // Predicated region
      $region25: #{tpu_custom_call.1} parent=5 // pred_check
        %p156 = pneg %p155
      $region26: #{tpu_custom_call.1} parent=5 // pred_check_branch
        %158 = sbr.rel (%p156) target = $region28
      $region27: #{tpu_custom_call.1} parent=5 // pred_region
        // Predicated region
        $region29: #{tpu_custom_call.1} parent=27 // pred_check
          %p159 = pneg %p36
        $region30: #{tpu_custom_call.1} parent=27 // pred_check_branch
          %161 = sbr.rel (%p159) target = $region32
        $region31: #{tpu_custom_call.1} parent=27 // pred_region
          %s162 = sand.u32 %s26, 1
          %s163 = scalar_lea.sflag [#allocation3], %s162
          %s164 = sand.u32 %s26, 1
          %s165 = smul.addr %s164, 16
          %s166 = scalar_lea.vmem [#allocation2], %s165
          %168 = vsyncadd %s163, 0
          %s169 = smul.addr %s16, 2
          %s170 = smul.addr %s169, 8
          %s171 = scalar_lea.hbm %s0, %s170
          %s173 = sshll.u32 %s171, 4
          %s174 = int_to_ptr.hbm [resolvable:$true] %s173
          %s175 = sshll.u32 %s166, 4
          %s176 = int_to_ptr.vmem [resolvable:$true] %s175
          %178 = dma.hbm_to_vmem [thread:$0]  %s174, 256, %s176, %s163
        $region32: #{tpu_custom_call.1} parent=27 // pred_fallthru
          _
      $region28: #{tpu_custom_call.1} parent=5 // pred_fallthru
        _
      %p179 = scmp.le.s32.totalorder 1, %s16
      %p180 = scmp.lt.s32.totalorder %s16, 3
      %p181 = pnand %p179, %p180
      %p182 = pneg %p181
      // Predicated region
      $region33: #{tpu_custom_call.1} parent=5 // pred_check
        _
      $region34: #{tpu_custom_call.1} parent=5 // pred_check_branch
        %184 = sbr.rel (%p181) target = $region36
      $region35: #{tpu_custom_call.1} parent=5 // pred_region
        %s185 = ssub.s32 %s16, 1
        %s186 = sand.u32 %s29, 1
        %s187 = scalar_lea.sflag [#allocation3], %s186
        %s188 = sand.u32 %s29, 1
        %s189 = smul.addr %s188, 16
        %s190 = scalar_lea.vmem [#allocation2], %s189
        // Predicated region
        $region37: #{tpu_custom_call.1} parent=35 // pred_check
          %p191 = pneg %p42
        $region38: #{tpu_custom_call.1} parent=35 // pred_check_branch
          %193 = sbr.rel (%p191) target = $region40
        $region39: #{tpu_custom_call.1} parent=35 // pred_region
          %195 = dma.done %s187, 256
        $region40: #{tpu_custom_call.1} parent=35 // pred_fallthru
          _
        %s196 = sand.u32 %s29, 1
        %s197 = scalar_lea.sflag [#allocation3], %s196
        %s198 = sand.u32 %s29, 1
        %s199 = smul.addr %s198, 16
        %s200 = scalar_lea.vmem [#allocation2], %s199
        %p201 = pneg %p42
        %p202 = pneg %p39
        %p203 = pneg %p63
        %p204 = pneg %p60
        %p205 = pneg %p84
        %p206 = pneg %p81
        %p207 = pneg %p105
        %p208 = pneg %p102
        %p209 = pneg %p131
        %p210 = pneg %p128
        %s211 = sand.u32 %s118, 1
        %s212 = scalar_lea.sflag [#allocation4], %s211
        %s213 = sand.u32 %s118, 1
        %s214 = smul.addr %s213, 16
        %s215 = scalar_lea.vmem [#allocation5], %s214
        %v216 = vld [vmem:[%s190] sm:$0xff]
        %v217 = vld [vmem:[%s190 + $0x8] sm:$0xff]
        %v218 = vadd.f32 %v216, %v217
        %219 = vadd.xlane.f32.xlu0 %v218
        %v220 = vpop.xlane.xlu0 %219
        %v221 = vmul.f32 %v220, 0.00390625
        %v222 = vld [vmem:[%s1] sm:$0xff]
        %v223 = vmul.f32 %v221, %v222
        %vm224 = vcmask 31744
        %v225 = vsel %vm224, %v223, 0.0
        %v226 = vrot.slane %v225, 4
        %v227 = vadd.f32 %v225, %v226
        %v228 = vrot.slane %v227, 2
        %v229 = vadd.f32 %v227, %v228
        %v230 = vrot.slane %v229, 1
        %v231 = vadd.f32 %v229, %v230
        %vm232 = vcmp.ge.f32.partialorder %v231, 0.0
        %v233 = vld [vmem:[%s2] sm:$0x1]
        %v234 = vmul.f32 %v233, %v231
        %v235 = vsel %vm232, %v231, %v234
        %v236 = vperm.slane %v235, 0
        %v237 = vlaneseq
        %v238 = vshrl.u32 %v237, 7
        %240 = vset.pattern.permute.xlu0 %v238
        %241 = vperm.xlu0 %240, %v236
        %v242 = vpop.permute.xlu0 %241
        %v243 = vld [vmem:[%s3] sm:$0xf]
        %v244 = vmul.f32 %v242, %v243
        %vm245 = vcmask 60416
        %v246 = vsel %vm245, %v244, 0.0
        %v247 = vrot.slane %v246, 4
        %v248 = vadd.f32 %v246, %v247
        %v249 = vrot.slane %v248, 2
        %v250 = vadd.f32 %v248, %v249
        %v251 = vrot.slane %v250, 1
        %v252 = vadd.f32 %v250, %v251
        %v253 = vxor.u32 %v252, 2147483648
        %v254 = vmul.f32 %v253, 1.442695
        %v255 = vpow.pop %v254
        %v256 = vadd.f32 %v255, 1.0
        %v257 = vrcp.pop %v256
        %v258 = vmul.f32 %v256, %v257
        %v259 = vsub.f32 1.0, %v258
        %v260 = vmul.f32 %v257, %v259
        %v261 = vadd.f32 %v257, %v260
        %vm262 = vweird.f32 %v256
        %vm263 = vweird.f32 %v257
        %vm264 = vmor %vm262, %vm263
        %v265 = vsel %vm264, %v257, %v261
        %v266 = vand.u32 2147483647, %v256
        %vm267 = vcmp.eq.f32.partialorder %v266, 8.507059e+37
        %v268 = vand.u32 %v256, 2147483648
        %v269 = vor.u32 1.1754944e-38, %v268
        %v270 = vsel %vm267, %v269, %v265
        %v271 = vmul.f32 1.0, %v270
        %v272 = vlaneseq
        %v273 = vshrl.u32 %v272, 7
        %275 = vset.pattern.permute.xlu0 %v273
        %276 = vperm.xlu0 %275, %v271
        %v277 = vpop.permute.xlu0 %276
        %v278 = vmul.f32 %v216, %v277
        %v279 = vmul.f32 %v217, %v277
        %280 = vst [vmem:[%s215] sm:$0xff] %v278
        %281 = vst [vmem:[%s215 + $0x8] sm:$0xff] %v279
        %s282 = sand.u32 %s118, 1
        %s283 = scalar_lea.sflag [#allocation4], %s282
        %s284 = sand.u32 %s118, 1
        %s285 = smul.addr %s284, 16
        %s286 = scalar_lea.vmem [#allocation5], %s285
        // Predicated region
        $region41: #{tpu_custom_call.1} parent=35 // pred_check
          %p287 = pneg %p128
        $region42: #{tpu_custom_call.1} parent=35 // pred_check_branch
          %289 = sbr.rel (%p287) target = $region44
        $region43: #{tpu_custom_call.1} parent=35 // pred_region
          %291 = vsyncadd %s283, 0
          %s292 = smul.addr %s21, 2
          %s293 = smul.addr %s292, 8
          %s294 = scalar_lea.hbm %s4, %s293
          %s296 = sshll.u32 %s286, 4
          %s297 = int_to_ptr.vmem [resolvable:$true] %s296
          %s298 = sshll.u32 %s294, 4
          %s299 = int_to_ptr.hbm [resolvable:$true] %s298
          %301 = dma.vmem_to_hbm [thread:$0]  %s297, 256, %s299, %s283
        $region44: #{tpu_custom_call.1} parent=35 // pred_fallthru
          _
      $region36: #{tpu_custom_call.1} parent=5 // pred_fallthru
        _
      %p302 = scmp.le.s32.totalorder 2, %s16
      // Predicated region
      $region45: #{tpu_custom_call.1} parent=5 // pred_check
        %p303 = pneg %p302
      $region46: #{tpu_custom_call.1} parent=5 // pred_check_branch
        %305 = sbr.rel (%p303) target = $region48
      $region47: #{tpu_custom_call.1} parent=5 // pred_region
        %s306 = ssub.s32 %s16, 2
        // Predicated region
        $region49: #{tpu_custom_call.1} parent=47 // pred_check
          %p307 = pneg %p134
        $region50: #{tpu_custom_call.1} parent=47 // pred_check_branch
          %309 = sbr.rel (%p307) target = $region52
        $region51: #{tpu_custom_call.1} parent=47 // pred_region
          %s310 = sand.u32 %s119, 1
          %s311 = scalar_lea.sflag [#allocation4], %s310
          %s312 = sand.u32 %s119, 1
          %s313 = smul.addr %s312, 16
          %s314 = scalar_lea.vmem [#allocation5], %s313
          %316 = dma.done %s311, 256
        $region52: #{tpu_custom_call.1} parent=47 // pred_fallthru
          _
      $region48: #{tpu_custom_call.1} parent=5 // pred_fallthru
        _
    $region6: #{tpu_custom_call.1} parent=1 // loop_footer
      %s20 = sadd.s32 1, %s16
    $region7: #{tpu_custom_call.1} parent=1 // loop_footer_branch
      %15 = sbr.rel target = $region3
    $region8: #{tpu_custom_call.1} parent=1 // loop_exit
      _
    %317 = vsyncpa [#allocation3], 1
    %s318 = scalar_lea.sflag [#allocation3], 1
    %319 = vsyncpa %s318, 1
    %320 = vsyncpa [#allocation4], 1
    %s321 = scalar_lea.sflag [#allocation4], 1
    %322 = vsyncpa %s321, 1

</llo_original>
